<compile_context>
chip_gen: v6e
topology: v6e:2x2x1
jax: 0.10.0
libtpu: 0.0.40
codegen_flags: <defaults>
</compile_context>

<pallas_src>
import functools

import jax
import jax.numpy as jnp
from jax.experimental import pallas as pl
from jax.experimental.pallas import tpu as pltpu

SELU_ALPHA = 1.6732632423543772
SELU_SCALE = 1.0507009873554805


def _round_up(x, m):
    return ((x + m - 1) // m) * m


def _cdiv(a, b):
    return -(-a // b)


# ---------------------------------------------------------------------------
# Pallas kernel: fused (patches @ folded_weight) + bias + SELU
# ---------------------------------------------------------------------------
def _conv_bn_selu_kernel(p_ref, w_ref, bias_ref, o_ref):
    # p_ref:    (TM, K)  bf16 im2col patch tile (K = KH*KW*Cin, unpadded)
    # w_ref:    (K, TN)  bf16 conv weight with BN scale pre-folded (f32 fold)
    # bias_ref: (1, TN)  f32 folded BN bias = beta - mean * gamma / sqrt(var + eps)
    acc = jnp.dot(p_ref[...], w_ref[...], preferred_element_type=jnp.float32)
    y = acc + bias_ref[...]
    # SELU in f32.  exp(min(y, 0)) keeps the untaken branch finite (no inf in select).
    neg = SELU_ALPHA * (jnp.exp(jnp.minimum(y, 0.0)) - 1.0)
    o_ref[...] = (SELU_SCALE * jnp.where(y > 0, y, neg)).astype(o_ref.dtype)


# ---------------------------------------------------------------------------
# Glue helpers
# ---------------------------------------------------------------------------
def _im2col_nhwc(x_nhwc, kh, kw, stride, padding, dilation):
    """Extract conv patches. Returns (N, OH, OW, KH*KW*Cin), (kh, kw, c) order."""
    n, h, w, c = x_nhwc.shape
    sh, sw = stride
    ph, pw = padding
    dh, dw = dilation
    x_pad = jnp.pad(x_nhwc, ((0, 0), (ph, ph), (pw, pw), (0, 0)))
    eff_kh = (kh - 1) * dh + 1
    eff_kw = (kw - 1) * dw + 1
    oh = (h + 2 * ph - eff_kh) // sh + 1
    ow = (w + 2 * pw - eff_kw) // sw + 1
    cols = []
    for ikh in range(kh):
        for ikw in range(kw):
            r0 = ikh * dh
            c0 = ikw * dw
            sl = x_pad[:, r0:r0 + (oh - 1) * sh + 1:sh,
                          c0:c0 + (ow - 1) * sw + 1:sw, :]
            cols.append(sl)
    patches = jnp.concatenate(cols, axis=-1)  # (N, OH, OW, KH*KW*Cin)
    return patches, oh, ow


def _physical_vmem_bytes():
    try:
        cap = getattr(pltpu.get_tpu_info(), "vmem_capacity_bytes", None)
        if cap:
            return int(cap)
    except Exception:
        pass
    return 64 * 1024 * 1024  # conservative default: v7x per-TensorCore VMEM


def _device_kind():
    try:
        return jax.devices()[0].device_kind.lower()
    except Exception:
        return ""


def _choose_tile_n(k_dim, cout_pad, budget_bytes, device_kind):
    # Resident weights: full (K, Cout_pad) bf16 weight, double-buffered, must fit a
    # quarter of the budget -> grid-constant block index, DMA'd exactly once.
    if 2 * k_dim * cout_pad * 2 <= budget_bytes // 4:
        return cout_pad
    # Fallback for very large Cout: 256 fills the 256-wide v6e/v7x MXU; v5e's MXU
    # is 128 wide, so keep 128 there.
    if cout_pad % 256 == 0 and "v5" not in device_kind:
        return 256
    return 128


def _choose_tile_m(m_dim, k_dim, tile_n, out_itemsize, budget_bytes):
    """Balanced M tile: as large as the VMEM budget allows (<= 4096), but always
    >= 2 tiles when M permits so both v7x TensorCores get a parallel block."""
    fixed = 2 * k_dim * tile_n * 2 + 4 * tile_n * 4          # weight + bias blocks
    per_row = 2 * k_dim * 2 + 2 * tile_n * out_itemsize      # patch + output rows
    avail = max(budget_bytes - fixed, 8 * per_row)
    cap = min(4096, max(8, (avail // per_row) // 8 * 8))
    m_aligned = _round_up(m_dim, 8)
    m_tiles = max(1, _cdiv(m_aligned, cap))
    if m_aligned >= 16:
        m_tiles = max(m_tiles, 2)
    return _round_up(_cdiv(m_dim, m_tiles), 8)


# ---------------------------------------------------------------------------
# Forward
# ---------------------------------------------------------------------------
def basic_conv2d_forward(x_nchw, conv_w, bn_gamma, bn_beta, bn_mean, bn_var,
                         stride=(1, 1), padding=(0, 0), dilation=(1, 1),
                         eps=1e-5, out_dtype=None):
    """Pallas implementation of BasicConv2d.forward (BN in inference mode)."""
    cout, cin, kh, kw = conv_w.shape
    n = x_nchw.shape[0]
    out_dtype = x_nchw.dtype if out_dtype is None else out_dtype
    out_itemsize = jnp.dtype(out_dtype).itemsize

    physical_vmem = _physical_vmem_bytes()
    vmem_limit = int(physical_vmem * 0.75)
    vmem_budget = vmem_limit // 2

    # --- glue: layout + im2col (patches built in bf16 to halve im2col HBM bytes) ---
    x_nhwc = jnp.transpose(x_nchw, (0, 2, 3, 1)).astype(jnp.bfloat16)
    patches, oh, ow = _im2col_nhwc(x_nhwc, kh, kw, stride, padding, dilation)
    k_dim = kh * kw * cin
    m_dim = n * oh * ow
    patches_2d = patches.reshape(m_dim, k_dim)

    # Fold BN (inference) into the weights in f32, then cast to bf16; only the bias
    # add remains in the kernel epilogue.
    scale = bn_gamma.astype(jnp.float32) / jnp.sqrt(bn_var.astype(jnp.float32) + eps)
    bias = bn_beta.astype(jnp.float32) - bn_mean.astype(jnp.float32) * scale
    w_2d = jnp.transpose(conv_w, (2, 3, 1, 0)).reshape(k_dim, cout).astype(jnp.float32)
    w_2d = (w_2d * scale[None, :]).astype(jnp.bfloat16)

    # --- tiling: K left unpadded (full-dim block), Cout padded lane-dense ---
    cout_pad = _round_up(cout, 128)
    tile_n = _choose_tile_n(k_dim, cout_pad, vmem_budget, _device_kind())
    tile_m = _choose_tile_m(m_dim, k_dim, tile_n, out_itemsize, vmem_budget)
    m_pad = _round_up(m_dim, tile_m)
    m_tiles = m_pad // tile_m
    n_tiles = cout_pad // tile_n

    if m_pad != m_dim:
        patches_2d = jnp.pad(patches_2d, ((0, m_pad - m_dim), (0, 0)))
    if cout_pad != cout:
        w_2d = jnp.pad(w_2d, ((0, 0), (0, cout_pad - cout)))
        bias = jnp.pad(bias, (0, cout_pad - cout))
    bias_2d = bias.reshape(1, cout_pad)

    # Weights fetched once when resident (n_tiles == 1); otherwise once per M tile
    # (M stays the outer axis so the big patch tensor always streams exactly once).
    weight_fetches = 1 if n_tiles == 1 else m_tiles
    cost = pl.CostEstimate(
        flops=2 * m_pad * k_dim * cout_pad,
        transcendentals=m_pad * cout_pad,
        bytes_accessed=(m_pad * k_dim * 2
                        + weight_fetches * k_dim * cout_pad * 2
                        + cout_pad * 4
                        + m_pad * cout_pad * out_itemsize),
    )

    out_2d = pl.pallas_call(
        _conv_bn_selu_kernel,
        out_shape=jax.ShapeDtypeStruct((m_pad, cout_pad), out_dtype),
        grid_spec=pltpu.PrefetchScalarGridSpec(
            num_scalar_prefetch=0,
            grid=(m_tiles, n_tiles),          # M outer, Cout inner
            in_specs=[
                pl.BlockSpec((tile_m, k_dim), lambda i, j: (i, 0)),
                pl.BlockSpec((k_dim, tile_n), lambda i, j: (0, j)),
                pl.BlockSpec((1, tile_n), lambda i, j: (0, j)),
            ],
            out_specs=pl.BlockSpec((tile_m, tile_n), lambda i, j: (i, j)),
        ),
        compiler_params=pltpu.CompilerParams(
            dimension_semantics=("parallel", "parallel"),
            vmem_limit_bytes=vmem_limit,
        ),
        cost_estimate=cost,
    )(patches_2d, w_2d, bias_2d)

    out_2d = out_2d[:m_dim, :cout]
    out_nhwc = out_2d.reshape(n, oh, ow, cout)
    # Kept only to honour nn.Conv2d's NCHW contract; skip if the consumer is NHWC.
    return jnp.transpose(out_nhwc, (0, 3, 1, 2))


# ---------------------------------------------------------------------------
# Reference (same bf16 operand quantization / f32 accumulation as the kernel)
# ---------------------------------------------------------------------------
def _reference_forward(x_nchw, conv_w, bn_gamma, bn_beta, bn_mean, bn_var,
                       stride, padding, dilation, eps=1e-5):
    scale = bn_gamma / jnp.sqrt(bn_var + eps)
    bias = bn_beta - bn_mean * scale
    w_folded = (conv_w * scale[:, None, None, None]).astype(jnp.bfloat16)
    y = jax.lax.conv_general_dilated(
        x_nchw.astype(jnp.bfloat16), w_folded,
        window_strides=stride,
        padding=[(padding[0], padding[0]), (padding[1], padding[1])],
        rhs_dilation=dilation,
        dimension_numbers=("NCHW", "OIHW", "NCHW"),
        preferred_element_type=jnp.float32)
    y = y + bias[None, :, None, None]
    return SELU_SCALE * jnp.where(y > 0, y, SELU_ALPHA * jnp.expm1(y))


if __name__ == "__main__":
    key = jax.random.PRNGKey(0)
    k_x, k_w, k_g, k_b, k_m, k_v = jax.random.split(key, 6)

    # Shapes consistent with BasicConv2d(in_channel=4, out_channel=8,
    # kernel_size=3, stride=1, padding=1)
    N, Cin, H, W = 2, 4, 16, 16
    Cout, KH, KW = 8, 3, 3
    stride, padding, dilation = (1, 1), (1, 1), (1, 1)

    x = jax.random.normal(k_x, (N, Cin, H, W), dtype=jnp.float32)
    conv_w = jax.random.normal(k_w, (Cout, Cin, KH, KW), dtype=jnp.float32) * 0.1
    bn_gamma = 1.0 + 0.1 * jax.random.normal(k_g, (Cout,), dtype=jnp.float32)
    bn_beta = 0.1 * jax.random.normal(k_b, (Cout,), dtype=jnp.float32)
    bn_mean = 0.05 * jax.random.normal(k_m, (Cout,), dtype=jnp.float32)
    bn_var = jnp.abs(1.0 + 0.1 * jax.random.normal(k_v, (Cout,), dtype=jnp.float32))

    fwd = jax.jit(functools.partial(basic_conv2d_forward,
                                    stride=stride, padding=padding, dilation=dilation))
    out = jax.block_until_ready(fwd(x, conv_w, bn_gamma, bn_beta, bn_mean, bn_var))

    ref = _reference_forward(x, conv_w, bn_gamma, bn_beta, bn_mean, bn_var,
                             stride, padding, dilation)
    assert out.shape == (N, Cout, H, W), out.shape
    max_err = float(jnp.max(jnp.abs(out - ref)))
    assert jnp.allclose(out, ref, atol=2e-3, rtol=2e-3), max_err

    print("KERNEL_OK")
</pallas_src>

<mosaic_0001>
module attributes {stable_mosaic.version = 11 : i64} {
  func.func @_conv_bn_selu_kernel(%arg0: i32, %arg1: i32, %arg2: memref<256x36xbf16, #tpu.memory_space<vmem>>, %arg3: memref<36x128xbf16, #tpu.memory_space<vmem>>, %arg4: memref<1x128xf32, #tpu.memory_space<vmem>>, %arg5: memref<256x128xf32, #tpu.memory_space<vmem>>) attributes {dimension_semantics = [#tpu.dimension_semantics<parallel>, #tpu.dimension_semantics<parallel>], iteration_bounds = array<i64: 2, 1>, scalar_prefetch = 0 : i64, scratch_operands = 0 : i64, tpu.core_type = #tpu.core_type<tc>, window_params = [{transform_indices = @transform_0, window_bounds = array<i64: 256, 36>}, {transform_indices = @transform_1, window_bounds = array<i64: 36, 128>}, {transform_indices = @transform_2, window_bounds = array<i64: 1, 128>}, {transform_indices = @transform_3, window_bounds = array<i64: 256, 128>}]} {
    %c0 = arith.constant 0 : index
    %c0_0 = arith.constant 0 : index
    %0 = vector.load %arg2[%c0, %c0_0] : memref<256x36xbf16, #tpu.memory_space<vmem>>, vector<256x36xbf16>
    %c0_1 = arith.constant 0 : index
    %c0_2 = arith.constant 0 : index
    %1 = vector.load %arg3[%c0_1, %c0_2] : memref<36x128xbf16, #tpu.memory_space<vmem>>, vector<36x128xbf16>
    %cst = arith.constant dense<0.000000e+00> : vector<256x128xf32>
    %2 = tpu.matmul %0, %1, %cst {dimension_numbers = #tpu.dot_dimension_numbers<[1], [0], [0], [1], [0, 0, 1, 1], [], []>} : vector<256x36xbf16>, vector<36x128xbf16>, vector<256x128xf32> -> vector<256x128xf32>
    %c0_3 = arith.constant 0 : index
    %c0_4 = arith.constant 0 : index
    %3 = vector.load %arg4[%c0_3, %c0_4] : memref<1x128xf32, #tpu.memory_space<vmem>>, vector<1x128xf32>
    %4 = vector.broadcast %3 : vector<1x128xf32> to vector<256x128xf32>
    %5 = arith.addf %2, %4 : vector<256x128xf32>
    %cst_5 = arith.constant 0.000000e+00 : f32
    %6 = vector.broadcast %cst_5 : f32 to vector<256x128xf32>
    %7 = arith.minimumf %5, %6 : vector<256x128xf32>
    %8 = math.exp %7 : vector<256x128xf32>
    %cst_6 = arith.constant 1.000000e+00 : f32
    %9 = vector.broadcast %cst_6 : f32 to vector<256x128xf32>
    %10 = arith.subf %8, %9 : vector<256x128xf32>
    %cst_7 = arith.constant 1.67326319 : f32
    %11 = vector.broadcast %cst_7 : f32 to vector<256x128xf32>
    %12 = arith.mulf %11, %10 : vector<256x128xf32>
    %cst_8 = arith.constant 0.000000e+00 : f32
    %13 = vector.broadcast %cst_8 : f32 to vector<256x128xf32>
    %14 = arith.cmpf ogt, %5, %13 : vector<256x128xf32>
    %15 = arith.select %14, %5, %12 : vector<256x128xi1>, vector<256x128xf32>
    %cst_9 = arith.constant 1.05070102 : f32
    %16 = vector.broadcast %cst_9 : f32 to vector<256x128xf32>
    %17 = arith.mulf %16, %15 : vector<256x128xf32>
    %c0_10 = arith.constant 0 : index
    %c0_11 = arith.constant 0 : index
    %18 = vector.load %arg5[%c0_10, %c0_11] : memref<256x128xf32, #tpu.memory_space<vmem>>, vector<256x128xf32>
    tpu.vector_store %arg5[%c0_10, %c0_11], %17 {strides = array<i32>} : memref<256x128xf32, #tpu.memory_space<vmem>>, vector<256x128xf32>,
    return
  }
  func.func @transform_0(%arg0: i32, %arg1: i32) -> (i32, i32) {
    %c0_i32 = arith.constant 0 : i32
    %c0_i32_0 = arith.constant 0 : i32
    return %arg0, %c0_i32 : i32, i32
  }
  func.func @transform_1(%arg0: i32, %arg1: i32) -> (i32, i32) {
    %c0_i32 = arith.constant 0 : i32
    %c0_i32_0 = arith.constant 0 : i32
    return %c0_i32, %arg1 : i32, i32
  }
  func.func @transform_2(%arg0: i32, %arg1: i32) -> (i32, i32) {
    %c0_i32 = arith.constant 0 : i32
    %c0_i32_0 = arith.constant 0 : i32
    return %c0_i32, %arg1 : i32, i32
  }
  func.func @transform_3(%arg0: i32, %arg1: i32) -> (i32, i32) {
    %c0_i32 = arith.constant 0 : i32
    return %arg0, %arg1 : i32, i32
  }
}

</mosaic_0001>

<llo_original>
// kernel: basic_conv2d_forward.1
$region0: #{basic_conv2d_forward.1}
  #allocation0 [shape = 'u32[]', space=smem, size = 0x4, offset = 0x4, fixed_abs, tag = 'smem constant byte address 0x4 - core index']
  #allocation1 [shape = 'u32[144,128]{1,0:T(1,128)}', space=vmem, size = 0x12000, scoped, tag = 'internal scratch']
  %s0 = inlined_call_operand.vmem [shape: bf16[512,36], index: 0, kind: input, shape index: {}]
  %s1 = inlined_call_operand.vmem [shape: bf16[36,128], index: 1, kind: input, shape index: {}]
  %s2 = inlined_call_operand.vmem [shape: f32[1,128], index: 2, kind: input, shape index: {}]
  %s3 = inlined_call_operand.vmem [shape: f32[512,128], index: 3, kind: output, shape index: {}]
  %s4 = sld [smem:[#allocation0]]
  $region45: #{basic_conv2d_forward.1} parent=0
    _
  %s6 = ssub.s32 1, %s4
  %s7 = scalar_select 0, %s6, %s4
  loop: start=0, step=1, limit=4
  $region2: #{basic_conv2d_forward.1} parent=0 // loop_pre_header
    _
  $region3: #{basic_conv2d_forward.1} parent=0 // loop_header
    %s9 = sphi 0, %s13
    %p10 = scmp.ge.s32.totalorder %s9, 4
    %s16 = sphi 0, %s28
    %s17 = sphi 0, %s24
    %s18 = sphi 0, %s16
    %s19 = sphi 0, %s17
    %s20 = sphi 0, %s18
    %s21 = sphi 0, %s19
    %s31 = sphi 0, %s33
    %s34 = sphi 0, %s31
    %s35 = sphi 0, %s34
    %s51 = sphi 0, %s35
    %s57 = sphi 0, %s59
    %s60 = sphi 0, %s57
    %s61 = sphi 0, %s60
    %s77 = sphi 0, %s61
    %s83 = sphi 0, %s85
    %s86 = sphi 0, %s83
    %s87 = sphi 0, %s86
    %s103 = sphi 0, %s87
    %s111 = sphi 0, %s113
    %s114 = sphi 0, %s111
    %s115 = sphi 0, %s114
    %s131 = sphi 0, %s115
  $region4: #{basic_conv2d_forward.1} parent=0 // loop_header_branch
    %12 = sbr.rel (%p10) target = $region8
  $region5: #{basic_conv2d_forward.1} parent=0 // loop_body
    %s14 = ssub.s32 %s9, 1
    %s15 = ssub.s32 %s9, 2
    %s22 = sadd.s32 1, %s17
    %p23 = scmp.ge.s32.totalorder %s22, 1
    %s24 = scalar_select %p23, 0, %s22
    %s25 = sadd.s32 1, %s16
    %s26 = scalar_select %p23, %s25, %s16
    %p27 = scmp.ge.s32.totalorder %s26, 2
    %s28 = scalar_select %p27, 0, %s26
    %s29 = ssub.s32 %s16, %s28
    %p30 = scmp.eq.s32.totalorder %s29, 0
    %s32 = sadd.s32 %s31, 1
    %s33 = scalar_select %p30, %s31, %s32
    %p36 = pneg %p30
    %p37 = scmp.eq.s32.totalorder %s9, 1
    %p38 = por %p36, %p37
    %p39 = scmp.ne.s32.totalorder %s31, %s34
    %p40 = scmp.eq.s32.totalorder %s9, 0
    %p41 = por %p39, %p40
    %p42 = scmp.ne.s32.totalorder %s31, %s34
    %p43 = scmp.eq.s32.totalorder %s14, 1
    %p44 = por %p42, %p43
    %p45 = scmp.ne.s32.totalorder %s34, %s35
    %p46 = scmp.eq.s32.totalorder %s14, 0
    %p47 = por %p45, %p46
    %p48 = scmp.ne.s32.totalorder %s34, %s35
    %p49 = scmp.eq.s32.totalorder %s15, 1
    %p50 = por %p48, %p49
    %p52 = scmp.ne.s32.totalorder %s35, %s51
    %p53 = scmp.eq.s32.totalorder %s15, 0
    %p54 = por %p52, %p53
    %s55 = ssub.s32 %s17, %s24
    %p56 = scmp.eq.s32.totalorder %s55, 0
    %s58 = sadd.s32 %s57, 1
    %s59 = scalar_select %p56, %s57, %s58
    %p62 = pneg %p56
    %p63 = scmp.eq.s32.totalorder %s9, 1
    %p64 = por %p62, %p63
    %p65 = scmp.ne.s32.totalorder %s57, %s60
    %p66 = scmp.eq.s32.totalorder %s9, 0
    %p67 = por %p65, %p66
    %p68 = scmp.ne.s32.totalorder %s57, %s60
    %p69 = scmp.eq.s32.totalorder %s14, 1
    %p70 = por %p68, %p69
    %p71 = scmp.ne.s32.totalorder %s60, %s61
    %p72 = scmp.eq.s32.totalorder %s14, 0
    %p73 = por %p71, %p72
    %p74 = scmp.ne.s32.totalorder %s60, %s61
    %p75 = scmp.eq.s32.totalorder %s15, 1
    %p76 = por %p74, %p75
    %p78 = scmp.ne.s32.totalorder %s61, %s77
    %p79 = scmp.eq.s32.totalorder %s15, 0
    %p80 = por %p78, %p79
    %s81 = ssub.s32 %s17, %s24
    %p82 = scmp.eq.s32.totalorder %s81, 0
    %s84 = sadd.s32 %s83, 1
    %s85 = scalar_select %p82, %s83, %s84
    %p88 = pneg %p82
    %p89 = scmp.eq.s32.totalorder %s9, 1
    %p90 = por %p88, %p89
    %p91 = scmp.ne.s32.totalorder %s83, %s86
    %p92 = scmp.eq.s32.totalorder %s9, 0
    %p93 = por %p91, %p92
    %p94 = scmp.ne.s32.totalorder %s83, %s86
    %p95 = scmp.eq.s32.totalorder %s14, 1
    %p96 = por %p94, %p95
    %p97 = scmp.ne.s32.totalorder %s86, %s87
    %p98 = scmp.eq.s32.totalorder %s14, 0
    %p99 = por %p97, %p98
    %p100 = scmp.ne.s32.totalorder %s86, %s87
    %p101 = scmp.eq.s32.totalorder %s15, 1
    %p102 = por %p100, %p101
    %p104 = scmp.ne.s32.totalorder %s87, %s103
    %p105 = scmp.eq.s32.totalorder %s15, 0
    %p106 = por %p104, %p105
    %s107 = ssub.s32 %s16, %s28
    %s108 = ssub.s32 %s17, %s24
    %s109 = sor.u32 %s107, %s108
    %p110 = scmp.eq.s32.totalorder %s109, 0
    %s112 = sadd.s32 %s111, 1
    %s113 = scalar_select %p110, %s111, %s112
    %p116 = pneg %p110
    %p117 = scmp.eq.s32.totalorder %s9, 1
    %p118 = por %p116, %p117
    %p119 = scmp.ne.s32.totalorder %s111, %s114
    %p120 = scmp.eq.s32.totalorder %s9, 0
    %p121 = por %p119, %p120
    %p122 = scmp.ne.s32.totalorder %s111, %s114
    %p123 = scmp.eq.s32.totalorder %s14, 1
    %p124 = por %p122, %p123
    %p125 = scmp.ne.s32.totalorder %s114, %s115
    %p126 = scmp.eq.s32.totalorder %s14, 0
    %p127 = por %p125, %p126
    %p128 = scmp.ne.s32.totalorder %s114, %s115
    %p129 = scmp.eq.s32.totalorder %s15, 1
    %p130 = por %p128, %p129
    %p132 = scmp.ne.s32.totalorder %s115, %s131
    %p133 = scmp.eq.s32.totalorder %s15, 0
    %p134 = por %p132, %p133
    %p135 = scmp.le.s32.totalorder 1, %s9
    %p136 = scmp.lt.s32.totalorder %s9, 3
    %p137 = pnand %p135, %p136
    %p138 = pneg %p137
    // Predicated region
    $region9: #{basic_conv2d_forward.1} parent=5 // pred_check
      _
    $region10: #{basic_conv2d_forward.1} parent=5 // pred_check_branch
      %140 = sbr.rel (%p137) target = $region12
    $region11: #{basic_conv2d_forward.1} parent=5 // pred_region
      %s141 = ssub.s32 %s9, 1
      // Predicated region
      $region13: #{basic_conv2d_forward.1} parent=11 // pred_check
        %p142 = pneg %p73
      $region14: #{basic_conv2d_forward.1} parent=11 // pred_check_branch
        %144 = sbr.rel (%p142) target = $region16
      $region15: #{basic_conv2d_forward.1} parent=11 // pred_region
        %p145 = scmp.lt.s32.totalorder %s19, 0
        %s146 = scalar_select %p145, %s19, 0
        %s147 = smul.addr %s146, 4
        %s148 = scalar_lea.vmem %s1, %s147
      $region16: #{basic_conv2d_forward.1} parent=11 // pred_fallthru
        _
      // Predicated region
      $region17: #{basic_conv2d_forward.1} parent=11 // pred_check
        %p149 = pneg %p99
      $region18: #{basic_conv2d_forward.1} parent=11 // pred_check_branch
        %151 = sbr.rel (%p149) target = $region20
      $region19: #{basic_conv2d_forward.1} parent=11 // pred_region
        %p152 = scmp.lt.s32.totalorder %s19, 0
        %s153 = scalar_select %p152, %s19, 0
        %s154 = scalar_lea.vmem %s2, %s153
      $region20: #{basic_conv2d_forward.1} parent=11 // pred_fallthru
        _
    $region12: #{basic_conv2d_forward.1} parent=5 // pred_fallthru
      _
    %p155 = scmp.lt.s32.totalorder %s9, 2
    // Predicated region
    $region21: #{basic_conv2d_forward.1} parent=5 // pred_check
      %p156 = pneg %p155
    $region22: #{basic_conv2d_forward.1} parent=5 // pred_check_branch
      %158 = sbr.rel (%p156) target = $region24
    $region23: #{basic_conv2d_forward.1} parent=5 // pred_region
      // Predicated region
      $region25: #{basic_conv2d_forward.1} parent=23 // pred_check
        %p159 = pneg %p41
      $region26: #{basic_conv2d_forward.1} parent=23 // pred_check_branch
        %161 = sbr.rel (%p159) target = $region28
      $region27: #{basic_conv2d_forward.1} parent=23 // pred_region
        %s162 = smul.u32 32, %s16
        %p163 = scmp.lt.s32.totalorder %s162, 63
        %s164 = scalar_select %p163, %s162, 63
        %s165 = smul.addr %s164, 4
        %s166 = scalar_lea.vmem %s0, %s165
        %s167 = smul.u32 32, %s16
      $region28: #{basic_conv2d_forward.1} parent=23 // pred_fallthru
        _
    $region24: #{basic_conv2d_forward.1} parent=5 // pred_fallthru
      _
    %p168 = scmp.le.s32.totalorder 1, %s9
    %p169 = scmp.lt.s32.totalorder %s9, 3
    %p170 = pnand %p168, %p169
    %p171 = pneg %p170
    // Predicated region
    $region29: #{basic_conv2d_forward.1} parent=5 // pred_check
      _
    $region30: #{basic_conv2d_forward.1} parent=5 // pred_check_branch
      %173 = sbr.rel (%p170) target = $region32
    $region31: #{basic_conv2d_forward.1} parent=5 // pred_region
      %s174 = ssub.s32 %s9, 1
      %s175 = smul.u32 32, %s18
      %p176 = scmp.lt.s32.totalorder %s175, 63
      %s177 = scalar_select %p176, %s175, 63
      %s178 = smul.addr %s177, 4
      %s179 = scalar_lea.vmem %s0, %s178
      %p180 = pneg %p47
      %p181 = pneg %p44
      %p182 = scmp.lt.s32.totalorder %s19, 0
      %s183 = scalar_select %p182, %s19, 0
      %s184 = smul.addr %s183, 4
      %s185 = scalar_lea.vmem %s1, %s184
      %p186 = pneg %p73
      %p187 = pneg %p70
      %p188 = scmp.lt.s32.totalorder %s19, 0
      %s189 = scalar_select %p188, %s19, 0
      %s190 = scalar_lea.vmem %s2, %s189
      %p191 = pneg %p99
      %p192 = pneg %p96
      %p193 = pneg %p127
      %p194 = pneg %p124
      %s195 = smul.u32 32, %s18
      %p196 = scmp.lt.s32.totalorder %s195, 63
      %s197 = scalar_select %p196, %s195, 63
      %p198 = scmp.lt.s32.totalorder %s19, 0
      %s199 = scalar_select %p198, %s19, 0
      %s200 = sadd.s32 %s199, %s197
      %s201 = smul.addr %s200, 8
      %s202 = scalar_lea.vmem %s3, %s201
      %s203 = smul.u32 32, %s18
      %p204 = scmp.lt.s32.totalorder %s203, 63
      %s205 = scalar_select %p204, %s203, 63
      %s206 = smul.addr %s205, 4
      %s207 = scalar_lea.vmem %s0, %s206
      %s208 = smul.u32 32, %s18
      %p209 = scmp.lt.s32.totalorder %s19, 0
      %s210 = scalar_select %p209, %s19, 0
      %s211 = smul.addr %s210, 4
      %s212 = scalar_lea.vmem %s1, %s211
      %p213 = scmp.lt.s32.totalorder %s19, 0
      %s214 = scalar_select %p213, %s19, 0
      %s215 = scalar_lea.vmem %s2, %s214
      %s216 = smul.u32 32, %s18
      %p217 = scmp.lt.s32.totalorder %s216, 63
      %s218 = scalar_select %p217, %s216, 63
      %p219 = scmp.lt.s32.totalorder %s19, 0
      %s220 = scalar_select %p219, %s19, 0
      %s221 = sadd.s32 %s220, %s218
      %s222 = smul.addr %s221, 8
      %s223 = scalar_lea.vmem %s3, %s222
      %s224 = smul.u32 32, %s18
      %v226 = vld [vmem:[%s207] sm:$0xf]
      %v227 = vld [vmem:[%s207 + $0x4] sm:$0xf]
      %v228 = vld [vmem:[%s207 + $0x8] sm:$0xf]
      %v229 = vld [vmem:[%s207 + $0xc] sm:$0xf]
      %v230 = vld [vmem:[%s207 + $0x10] sm:$0xf]
      %v231 = vld [vmem:[%s207 + $0x14] sm:$0xf]
      %v232 = vld [vmem:[%s207 + $0x18] sm:$0xf]
      %v233 = vld [vmem:[%s207 + $0x1c] sm:$0xf]
      %v234 = vld [vmem:[%s207 + $0x20] sm:$0xf]
      %v235 = vld [vmem:[%s207 + $0x24] sm:$0xf]
      %v236 = vld [vmem:[%s207 + $0x28] sm:$0xf]
      %v237 = vld [vmem:[%s207 + $0x2c] sm:$0xf]
      %v238 = vld [vmem:[%s207 + $0x30] sm:$0xf]
      %v239 = vld [vmem:[%s207 + $0x34] sm:$0xf]
      %v240 = vld [vmem:[%s207 + $0x38] sm:$0xf]
      %v241 = vld [vmem:[%s207 + $0x3c] sm:$0xf]
      %v242 = vld [vmem:[%s207 + $0x40] sm:$0xf]
      %v243 = vld [vmem:[%s207 + $0x44] sm:$0xf]
      %v244 = vld [vmem:[%s207 + $0x48] sm:$0xf]
      %v245 = vld [vmem:[%s207 + $0x4c] sm:$0xf]
      %v246 = vld [vmem:[%s207 + $0x50] sm:$0xf]
      %v247 = vld [vmem:[%s207 + $0x54] sm:$0xf]
      %v248 = vld [vmem:[%s207 + $0x58] sm:$0xf]
      %v249 = vld [vmem:[%s207 + $0x5c] sm:$0xf]
      %v250 = vld [vmem:[%s207 + $0x60] sm:$0xf]
      %v251 = vld [vmem:[%s207 + $0x64] sm:$0xf]
      %v252 = vld [vmem:[%s207 + $0x68] sm:$0xf]
      %v253 = vld [vmem:[%s207 + $0x6c] sm:$0xf]
      %v254 = vld [vmem:[%s207 + $0x70] sm:$0xf]
      %v255 = vld [vmem:[%s207 + $0x74] sm:$0xf]
      %v256 = vld [vmem:[%s207 + $0x78] sm:$0xf]
      %v257 = vld [vmem:[%s207 + $0x7c] sm:$0xf]
      %v258 = vld [vmem:[%s212] sm:$0xf]
      %v259 = vld [vmem:[%s212 + $0x4] sm:$0xf]
      %v260 = vld [vmem:[%s212 + $0x8] sm:$0xf]
      %v261 = vld [vmem:[%s212 + $0xc] sm:$0xf]
      %v262 = vld [vmem:[%s212 + $0x10] sm:$0x3]
      %v263 = vld [vmem:[%s215] sm:$0x1]
      %v265 = vlaneseq
      %v266 = vshrl.u32 %v265, 7
      %v267 = vsub.s32 0, %v266
      %v268 = vrot.slane %v263, %v267
      %v302 = vunpack.c.l.b16 %v226
      %v303 = vunpack.c.l.b16 %v227
      %v304 = vunpack.c.l.b16 %v228
      %v305 = vunpack.c.l.b16 %v229
      %v306 = vunpack.c.l.b16 %v230
      %v307 = vunpack.c.l.b16 %v231
      %v308 = vunpack.c.l.b16 %v232
      %v309 = vunpack.c.l.b16 %v233
      %v310 = vunpack.c.l.b16 %v234
      %v311 = vunpack.c.l.b16 %v235
      %v312 = vunpack.c.l.b16 %v236
      %v313 = vunpack.c.l.b16 %v237
      %v314 = vunpack.c.l.b16 %v238
      %v315 = vunpack.c.l.b16 %v239
      %v316 = vunpack.c.l.b16 %v240
      %v317 = vunpack.c.l.b16 %v241
      %v318 = vunpack.c.l.b16 %v242
      %v319 = vunpack.c.l.b16 %v243
      %v320 = vunpack.c.l.b16 %v244
      %v321 = vunpack.c.l.b16 %v245
      %v322 = vunpack.c.l.b16 %v246
      %v323 = vunpack.c.l.b16 %v247
      %v324 = vunpack.c.l.b16 %v248
      %v325 = vunpack.c.l.b16 %v249
      %v326 = vunpack.c.l.b16 %v250
      %v327 = vunpack.c.l.b16 %v251
      %v328 = vunpack.c.l.b16 %v252
      %v329 = vunpack.c.l.b16 %v253
      %v330 = vunpack.c.l.b16 %v254
      %v331 = vunpack.c.l.b16 %v255
      %v332 = vunpack.c.l.b16 %v256
      %v333 = vunpack.c.l.b16 %v257
      %v334 = vpack.c.b16 %v303, %v302
      %v335 = vpack.c.b16 %v305, %v304
      %v336 = vpack.c.b16 %v307, %v306
      %v337 = vpack.c.b16 %v309, %v308
      %v338 = vpack.c.b16 %v311, %v310
      %v339 = vpack.c.b16 %v313, %v312
      %v340 = vpack.c.b16 %v315, %v314
      %v341 = vpack.c.b16 %v317, %v316
      %v342 = vpack.c.b16 %v319, %v318
      %v343 = vpack.c.b16 %v321, %v320
      %v344 = vpack.c.b16 %v323, %v322
      %v345 = vpack.c.b16 %v325, %v324
      %v346 = vpack.c.b16 %v327, %v326
      %v347 = vpack.c.b16 %v329, %v328
      %v348 = vpack.c.b16 %v331, %v330
      %v349 = vpack.c.b16 %v333, %v332
      %v355 = vunpack.c.l.b16 %v258
      %v356 = vunpack.c.l.b16 %v259
      %v357 = vunpack.c.l.b16 %v260
      %v358 = vunpack.c.l.b16 %v261
      %v359 = vunpack.c.l.b16 %v262
      %v360 = vpack.c.b16 %v356, %v355
      %v361 = vpack.c.b16 %v358, %v357
      %v362 = vpack.c.b16 %v359, %v359
      %vm365 = vcmask 293888
      %v367 = vsel %vm365, %v334, 0
      %v370 = vsel %vm365, %v335, 0
      %v373 = vsel %vm365, %v336, 0
      %v376 = vsel %vm365, %v337, 0
      %v379 = vsel %vm365, %v338, 0
      %v382 = vsel %vm365, %v339, 0
      %v385 = vsel %vm365, %v340, 0
      %v388 = vsel %vm365, %v341, 0
      %v391 = vsel %vm365, %v342, 0
      %v394 = vsel %vm365, %v343, 0
      %v397 = vsel %vm365, %v344, 0
      %v400 = vsel %vm365, %v345, 0
      %v403 = vsel %vm365, %v346, 0
      %v406 = vsel %vm365, %v347, 0
      %v409 = vsel %vm365, %v348, 0
      %v412 = vsel %vm365, %v349, 0
      %vm414 = vcmask 1041408
      %v416 = vsel %vm414, %v362, 0
      %418 = vmatprep.subr.bf16.mxu0 0
      %419 = vmatpush1.bf16.msra.mxu0 0
      %420 = vmatprep.subr.bf16.mxu0 0
      %421 = vmatpush1.bf16.msra.mxu0 0
      %422 = vmatprep.subr.bf16.mxu0 0
      %423 = vmatpush1.bf16.msra.mxu0 0
      %424 = vmatprep.subr.bf16.mxu0 0
      %425 = vmatpush1.bf16.msra.mxu0 0
      %426 = vmatprep.subr.bf16.mxu0 0
      %427 = vmatpush1.bf16.msra.mxu0 0
      %428 = vmatprep.subr.bf16.mxu0 0
      %429 = vmatpush1.bf16.msra.mxu0 %v416
      %430 = vmatprep.subr.bf16.mxu0 0
      %431 = vmatpush1.bf16.msra.mxu0 %v361
      %432 = vmatprep.subr.bf16.mxu0 0
      %433 = vmatpush1.bf16.msra.mxu0 %v360
      %434 = vmatprep.subr.bf16.mxu0 0
      %435 = vmatpush2.bf16.msra.mxu0 0
      %436 = vmatprep.subr.bf16.mxu0 0
      %437 = vmatpush2.bf16.msra.mxu0 0
      %438 = vmatprep.subr.bf16.mxu0 0
      %439 = vmatpush2.bf16.msra.mxu0 0
      %440 = vmatprep.subr.bf16.mxu0 0
      %441 = vmatpush2.bf16.msra.mxu0 0
      %442 = vmatprep.subr.bf16.mxu0 0
      %443 = vmatpush2.bf16.msra.mxu0 0
      %444 = vmatprep.subr.bf16.mxu0 0
      %445 = vmatpush2.bf16.msra.mxu0 0
      %446 = vmatprep.subr.bf16.mxu0 0
      %447 = vmatpush2.bf16.msra.mxu0 0
      %448 = vmatprep.subr.bf16.mxu0 0
      %449 = vmatpush2.bf16.msra.mxu0 0
      %450 = vmatprep.mubr.bf16.mxu0 0
      %451 = vmatmul.mubr.bf16.gmra.mxu0 %v367
      %v452 = vpop.f32.mrf.mxu0
      %v453 = vadd.f32 %v268, %v452
      %v454 = vpop.f32.mrf.mxu0
      %v455 = vpop.f32.mrf.mxu0
      %v456 = vadd.f32 %v268, %v455
      %v457 = vpop.f32.mrf.mxu0
      %458 = vmatprep.mubr.bf16.mxu0 0
      %459 = vmatmul.mubr.bf16.gmra.mxu0 %v370
      %v460 = vpop.f32.mrf.mxu0
      %v461 = vadd.f32 %v268, %v460
      %v462 = vpop.f32.mrf.mxu0
      %v463 = vpop.f32.mrf.mxu0
      %v464 = vadd.f32 %v268, %v463
      %v465 = vpop.f32.mrf.mxu0
      %466 = vmatprep.mubr.bf16.mxu0 0
      %467 = vmatmul.mubr.bf16.gmra.mxu0 %v373
      %v468 = vpop.f32.mrf.mxu0
      %v469 = vadd.f32 %v268, %v468
      %v470 = vpop.f32.mrf.mxu0
      %v471 = vpop.f32.mrf.mxu0
      %v472 = vadd.f32 %v268, %v471
      %v473 = vpop.f32.mrf.mxu0
      %474 = vmatprep.mubr.bf16.mxu0 0
      %475 = vmatmul.mubr.bf16.gmra.mxu0 %v376
      %v476 = vpop.f32.mrf.mxu0
      %v477 = vadd.f32 %v268, %v476
      %v478 = vpop.f32.mrf.mxu0
      %v479 = vpop.f32.mrf.mxu0
      %v480 = vadd.f32 %v268, %v479
      %v481 = vpop.f32.mrf.mxu0
      %482 = vmatprep.mubr.bf16.mxu0 0
      %483 = vmatmul.mubr.bf16.gmra.mxu0 %v379
      %v484 = vpop.f32.mrf.mxu0
      %v485 = vadd.f32 %v268, %v484
      %v486 = vpop.f32.mrf.mxu0
      %v487 = vpop.f32.mrf.mxu0
      %v488 = vadd.f32 %v268, %v487
      %v489 = vpop.f32.mrf.mxu0
      %490 = vmatprep.mubr.bf16.mxu0 0
      %491 = vmatmul.mubr.bf16.gmra.mxu0 %v382
      %v492 = vpop.f32.mrf.mxu0
      %v493 = vadd.f32 %v268, %v492
      %v494 = vpop.f32.mrf.mxu0
      %v495 = vpop.f32.mrf.mxu0
      %v496 = vadd.f32 %v268, %v495
      %v497 = vpop.f32.mrf.mxu0
      %498 = vmatprep.mubr.bf16.mxu0 0
      %499 = vmatmul.mubr.bf16.gmra.mxu0 %v385
      %v500 = vpop.f32.mrf.mxu0
      %v501 = vadd.f32 %v268, %v500
      %v502 = vpop.f32.mrf.mxu0
      %v503 = vpop.f32.mrf.mxu0
      %v504 = vadd.f32 %v268, %v503
      %v505 = vpop.f32.mrf.mxu0
      %506 = vmatprep.mubr.bf16.mxu0 0
      %507 = vmatmul.mubr.bf16.gmra.mxu0 %v388
      %v508 = vpop.f32.mrf.mxu0
      %v509 = vadd.f32 %v268, %v508
      %v510 = vpop.f32.mrf.mxu0
      %v511 = vpop.f32.mrf.mxu0
      %v512 = vadd.f32 %v268, %v511
      %v513 = vpop.f32.mrf.mxu0
      %514 = vmatprep.mubr.bf16.mxu0 0
      %515 = vmatmul.mubr.bf16.gmra.mxu0 %v391
      %v516 = vpop.f32.mrf.mxu0
      %v517 = vadd.f32 %v268, %v516
      %v518 = vpop.f32.mrf.mxu0
      %v519 = vpop.f32.mrf.mxu0
      %v520 = vadd.f32 %v268, %v519
      %v521 = vpop.f32.mrf.mxu0
      %522 = vmatprep.mubr.bf16.mxu0 0
      %523 = vmatmul.mubr.bf16.gmra.mxu0 %v394
      %v524 = vpop.f32.mrf.mxu0
      %v525 = vadd.f32 %v268, %v524
      %v526 = vpop.f32.mrf.mxu0
      %v527 = vpop.f32.mrf.mxu0
      %v528 = vadd.f32 %v268, %v527
      %v529 = vpop.f32.mrf.mxu0
      %530 = vmatprep.mubr.bf16.mxu0 0
      %531 = vmatmul.mubr.bf16.gmra.mxu0 %v397
      %v532 = vpop.f32.mrf.mxu0
      %v533 = vadd.f32 %v268, %v532
      %v534 = vpop.f32.mrf.mxu0
      %v535 = vpop.f32.mrf.mxu0
      %v536 = vadd.f32 %v268, %v535
      %v537 = vpop.f32.mrf.mxu0
      %538 = vmatprep.mubr.bf16.mxu0 0
      %539 = vmatmul.mubr.bf16.gmra.mxu0 %v400
      %v540 = vpop.f32.mrf.mxu0
      %v541 = vadd.f32 %v268, %v540
      %v542 = vpop.f32.mrf.mxu0
      %v543 = vpop.f32.mrf.mxu0
      %v544 = vadd.f32 %v268, %v543
      %v545 = vpop.f32.mrf.mxu0
      %546 = vmatprep.mubr.bf16.mxu0 0
      %547 = vmatmul.mubr.bf16.gmra.mxu0 %v403
      %v548 = vpop.f32.mrf.mxu0
      %v549 = vadd.f32 %v268, %v548
      %v550 = vpop.f32.mrf.mxu0
      %v551 = vpop.f32.mrf.mxu0
      %v552 = vadd.f32 %v268, %v551
      %v553 = vpop.f32.mrf.mxu0
      %554 = vmatprep.mubr.bf16.mxu0 0
      %555 = vmatmul.mubr.bf16.gmra.mxu0 %v406
      %v556 = vpop.f32.mrf.mxu0
      %v557 = vadd.f32 %v268, %v556
      %v558 = vpop.f32.mrf.mxu0
      %v559 = vpop.f32.mrf.mxu0
      %v560 = vadd.f32 %v268, %v559
      %v561 = vpop.f32.mrf.mxu0
      %562 = vmatprep.mubr.bf16.mxu0 0
      %563 = vmatmul.mubr.bf16.gmra.mxu0 %v409
      %v564 = vpop.f32.mrf.mxu0
      %v565 = vadd.f32 %v268, %v564
      %v566 = vpop.f32.mrf.mxu0
      %v567 = vpop.f32.mrf.mxu0
      %v568 = vadd.f32 %v268, %v567
      %v569 = vpop.f32.mrf.mxu0
      %570 = vmatprep.mubr.bf16.mxu0 0
      %571 = vmatmul.mubr.bf16.gmra.mxu0 %v412
      %v572 = vpop.f32.mrf.mxu0
      %v573 = vadd.f32 %v268, %v572
      %v574 = vpop.f32.mrf.mxu0
      %v575 = vpop.f32.mrf.mxu0
      %v576 = vadd.f32 %v268, %v575
      %v577 = vpop.f32.mrf.mxu0
      %578 = vdwg.mxu0
      %v579 = vmin.f32 %v453, 0.0
      %v580 = vmin.f32 %v456, 0.0
      %v581 = vmin.f32 %v461, 0.0
      %v582 = vmin.f32 %v464, 0.0
      %v583 = vmin.f32 %v469, 0.0
      %v584 = vmin.f32 %v472, 0.0
      %v585 = vmin.f32 %v477, 0.0
      %v586 = vmin.f32 %v480, 0.0
      %v587 = vmin.f32 %v485, 0.0
      %v588 = vmin.f32 %v488, 0.0
      %v589 = vmin.f32 %v493, 0.0
      %v590 = vmin.f32 %v496, 0.0
      %v591 = vmin.f32 %v501, 0.0
      %v592 = vmin.f32 %v504, 0.0
      %v593 = vmin.f32 %v509, 0.0
      %v594 = vmin.f32 %v512, 0.0
      %v595 = vmin.f32 %v517, 0.0
      %v596 = vmin.f32 %v520, 0.0
      %v597 = vmin.f32 %v525, 0.0
      %v598 = vmin.f32 %v528, 0.0
      %v599 = vmin.f32 %v533, 0.0
      %v600 = vmin.f32 %v536, 0.0
      %v601 = vmin.f32 %v541, 0.0
      %v602 = vmin.f32 %v544, 0.0
      %v603 = vmin.f32 %v549, 0.0
      %v604 = vmin.f32 %v552, 0.0
      %v605 = vmin.f32 %v557, 0.0
      %v606 = vmin.f32 %v560, 0.0
      %v607 = vmin.f32 %v565, 0.0
      %v608 = vmin.f32 %v568, 0.0
      %v609 = vmin.f32 %v573, 0.0
      %v610 = vmin.f32 %v576, 0.0
      %v611 = vmul.f32 %v579, 1.442695
      %v612 = vpow.pop %v611
      %v613 = vmul.f32 %v580, 1.442695
      %v614 = vpow.pop %v613
      %v615 = vmul.f32 %v581, 1.442695
      %v616 = vpow.pop %v615
      %v617 = vmul.f32 %v582, 1.442695
      %v618 = vpow.pop %v617
      %v619 = vmul.f32 %v583, 1.442695
      %v620 = vpow.pop %v619
      %v621 = vmul.f32 %v584, 1.442695
      %v622 = vpow.pop %v621
      %v623 = vmul.f32 %v585, 1.442695
      %v624 = vpow.pop %v623
      %v625 = vmul.f32 %v586, 1.442695
      %v626 = vpow.pop %v625
      %v627 = vmul.f32 %v587, 1.442695
      %v628 = vpow.pop %v627
      %v629 = vmul.f32 %v588, 1.442695
      %v630 = vpow.pop %v629
      %v631 = vmul.f32 %v589, 1.442695
      %v632 = vpow.pop %v631
      %v633 = vmul.f32 %v590, 1.442695
      %v634 = vpow.pop %v633
      %v635 = vmul.f32 %v591, 1.442695
      %v636 = vpow.pop %v635
      %v637 = vmul.f32 %v592, 1.442695
      %v638 = vpow.pop %v637
      %v639 = vmul.f32 %v593, 1.442695
      %v640 = vpow.pop %v639
      %v641 = vmul.f32 %v594, 1.442695
      %v642 = vpow.pop %v641
      %v643 = vmul.f32 %v595, 1.442695
      %v644 = vpow.pop %v643
      %v645 = vmul.f32 %v596, 1.442695
      %v646 = vpow.pop %v645
      %v647 = vmul.f32 %v597, 1.442695
      %v648 = vpow.pop %v647
      %v649 = vmul.f32 %v598, 1.442695
      %v650 = vpow.pop %v649
      %v651 = vmul.f32 %v599, 1.442695
      %v652 = vpow.pop %v651
      %v653 = vmul.f32 %v600, 1.442695
      %v654 = vpow.pop %v653
      %v655 = vmul.f32 %v601, 1.442695
      %v656 = vpow.pop %v655
      %v657 = vmul.f32 %v602, 1.442695
      %v658 = vpow.pop %v657
      %v659 = vmul.f32 %v603, 1.442695
      %v660 = vpow.pop %v659
      %v661 = vmul.f32 %v604, 1.442695
      %v662 = vpow.pop %v661
      %v663 = vmul.f32 %v605, 1.442695
      %v664 = vpow.pop %v663
      %v665 = vmul.f32 %v606, 1.442695
      %v666 = vpow.pop %v665
      %v667 = vmul.f32 %v607, 1.442695
      %v668 = vpow.pop %v667
      %v669 = vmul.f32 %v608, 1.442695
      %v670 = vpow.pop %v669
      %v671 = vmul.f32 %v609, 1.442695
      %v672 = vpow.pop %v671
      %v673 = vmul.f32 %v610, 1.442695
      %v674 = vpow.pop %v673
      %v675 = vsub.f32 %v612, 1.0
      %v676 = vsub.f32 %v614, 1.0
      %v677 = vsub.f32 %v616, 1.0
      %v678 = vsub.f32 %v618, 1.0
      %v679 = vsub.f32 %v620, 1.0
      %v680 = vsub.f32 %v622, 1.0
      %v681 = vsub.f32 %v624, 1.0
      %v682 = vsub.f32 %v626, 1.0
      %v683 = vsub.f32 %v628, 1.0
      %v684 = vsub.f32 %v630, 1.0
      %v685 = vsub.f32 %v632, 1.0
      %v686 = vsub.f32 %v634, 1.0
      %v687 = vsub.f32 %v636, 1.0
      %v688 = vsub.f32 %v638, 1.0
      %v689 = vsub.f32 %v640, 1.0
      %v690 = vsub.f32 %v642, 1.0
      %v691 = vsub.f32 %v644, 1.0
      %v692 = vsub.f32 %v646, 1.0
      %v693 = vsub.f32 %v648, 1.0
      %v694 = vsub.f32 %v650, 1.0
      %v695 = vsub.f32 %v652, 1.0
      %v696 = vsub.f32 %v654, 1.0
      %v697 = vsub.f32 %v656, 1.0
      %v698 = vsub.f32 %v658, 1.0
      %v699 = vsub.f32 %v660, 1.0
      %v700 = vsub.f32 %v662, 1.0
      %v701 = vsub.f32 %v664, 1.0
      %v702 = vsub.f32 %v666, 1.0
      %v703 = vsub.f32 %v668, 1.0
      %v704 = vsub.f32 %v670, 1.0
      %v705 = vsub.f32 %v672, 1.0
      %v706 = vsub.f32 %v674, 1.0
      %v707 = vmul.f32 %v675, 1.6732632
      %v708 = vmul.f32 %v676, 1.6732632
      %v709 = vmul.f32 %v677, 1.6732632
      %v710 = vmul.f32 %v678, 1.6732632
      %v711 = vmul.f32 %v679, 1.6732632
      %v712 = vmul.f32 %v680, 1.6732632
      %v713 = vmul.f32 %v681, 1.6732632
      %v714 = vmul.f32 %v682, 1.6732632
      %v715 = vmul.f32 %v683, 1.6732632
      %v716 = vmul.f32 %v684, 1.6732632
      %v717 = vmul.f32 %v685, 1.6732632
      %v718 = vmul.f32 %v686, 1.6732632
      %v719 = vmul.f32 %v687, 1.6732632
      %v720 = vmul.f32 %v688, 1.6732632
      %v721 = vmul.f32 %v689, 1.6732632
      %v722 = vmul.f32 %v690, 1.6732632
      %v723 = vmul.f32 %v691, 1.6732632
      %v724 = vmul.f32 %v692, 1.6732632
      %v725 = vmul.f32 %v693, 1.6732632
      %v726 = vmul.f32 %v694, 1.6732632
      %v727 = vmul.f32 %v695, 1.6732632
      %v728 = vmul.f32 %v696, 1.6732632
      %v729 = vmul.f32 %v697, 1.6732632
      %v730 = vmul.f32 %v698, 1.6732632
      %v731 = vmul.f32 %v699, 1.6732632
      %v732 = vmul.f32 %v700, 1.6732632
      %v733 = vmul.f32 %v701, 1.6732632
      %v734 = vmul.f32 %v702, 1.6732632
      %v735 = vmul.f32 %v703, 1.6732632
      %v736 = vmul.f32 %v704, 1.6732632
      %v737 = vmul.f32 %v705, 1.6732632
      %v738 = vmul.f32 %v706, 1.6732632
      %vm739 = vcmp.gt.f32.partialorder %v453, 0.0
      %vm740 = vcmp.gt.f32.partialorder %v456, 0.0
      %vm741 = vcmp.gt.f32.partialorder %v461, 0.0
      %vm742 = vcmp.gt.f32.partialorder %v464, 0.0
      %vm743 = vcmp.gt.f32.partialorder %v469, 0.0
      %vm744 = vcmp.gt.f32.partialorder %v472, 0.0
      %vm745 = vcmp.gt.f32.partialorder %v477, 0.0
      %vm746 = vcmp.gt.f32.partialorder %v480, 0.0
      %vm747 = vcmp.gt.f32.partialorder %v485, 0.0
      %vm748 = vcmp.gt.f32.partialorder %v488, 0.0
      %vm749 = vcmp.gt.f32.partialorder %v493, 0.0
      %vm750 = vcmp.gt.f32.partialorder %v496, 0.0
      %vm751 = vcmp.gt.f32.partialorder %v501, 0.0
      %vm752 = vcmp.gt.f32.partialorder %v504, 0.0
      %vm753 = vcmp.gt.f32.partialorder %v509, 0.0
      %vm754 = vcmp.gt.f32.partialorder %v512, 0.0
      %vm755 = vcmp.gt.f32.partialorder %v517, 0.0
      %vm756 = vcmp.gt.f32.partialorder %v520, 0.0
      %vm757 = vcmp.gt.f32.partialorder %v525, 0.0
      %vm758 = vcmp.gt.f32.partialorder %v528, 0.0
      %vm759 = vcmp.gt.f32.partialorder %v533, 0.0
      %vm760 = vcmp.gt.f32.partialorder %v536, 0.0
      %vm761 = vcmp.gt.f32.partialorder %v541, 0.0
      %vm762 = vcmp.gt.f32.partialorder %v544, 0.0
      %vm763 = vcmp.gt.f32.partialorder %v549, 0.0
      %vm764 = vcmp.gt.f32.partialorder %v552, 0.0
      %vm765 = vcmp.gt.f32.partialorder %v557, 0.0
      %vm766 = vcmp.gt.f32.partialorder %v560, 0.0
      %vm767 = vcmp.gt.f32.partialorder %v565, 0.0
      %vm768 = vcmp.gt.f32.partialorder %v568, 0.0
      %vm769 = vcmp.gt.f32.partialorder %v573, 0.0
      %vm770 = vcmp.gt.f32.partialorder %v576, 0.0
      %v771 = vsel %vm739, %v453, %v707
      %v772 = vsel %vm740, %v456, %v708
      %v773 = vsel %vm741, %v461, %v709
      %v774 = vsel %vm742, %v464, %v710
      %v775 = vsel %vm743, %v469, %v711
      %v776 = vsel %vm744, %v472, %v712
      %v777 = vsel %vm745, %v477, %v713
      %v778 = vsel %vm746, %v480, %v714
      %v779 = vsel %vm747, %v485, %v715
      %v780 = vsel %vm748, %v488, %v716
      %v781 = vsel %vm749, %v493, %v717
      %v782 = vsel %vm750, %v496, %v718
      %v783 = vsel %vm751, %v501, %v719
      %v784 = vsel %vm752, %v504, %v720
      %v785 = vsel %vm753, %v509, %v721
      %v786 = vsel %vm754, %v512, %v722
      %v787 = vsel %vm755, %v517, %v723
      %v788 = vsel %vm756, %v520, %v724
      %v789 = vsel %vm757, %v525, %v725
      %v790 = vsel %vm758, %v528, %v726
      %v791 = vsel %vm759, %v533, %v727
      %v792 = vsel %vm760, %v536, %v728
      %v793 = vsel %vm761, %v541, %v729
      %v794 = vsel %vm762, %v544, %v730
      %v795 = vsel %vm763, %v549, %v731
      %v796 = vsel %vm764, %v552, %v732
      %v797 = vsel %vm765, %v557, %v733
      %v798 = vsel %vm766, %v560, %v734
      %v799 = vsel %vm767, %v565, %v735
      %v800 = vsel %vm768, %v568, %v736
      %v801 = vsel %vm769, %v573, %v737
      %v802 = vsel %vm770, %v576, %v738
      %v803 = vmul.f32 %v771, 1.050701
      %v804 = vmul.f32 %v772, 1.050701
      %v805 = vmul.f32 %v773, 1.050701
      %v806 = vmul.f32 %v774, 1.050701
      %v807 = vmul.f32 %v775, 1.050701
      %v808 = vmul.f32 %v776, 1.050701
      %v809 = vmul.f32 %v777, 1.050701
      %v810 = vmul.f32 %v778, 1.050701
      %v811 = vmul.f32 %v779, 1.050701
      %v812 = vmul.f32 %v780, 1.050701
      %v813 = vmul.f32 %v781, 1.050701
      %v814 = vmul.f32 %v782, 1.050701
      %v815 = vmul.f32 %v783, 1.050701
      %v816 = vmul.f32 %v784, 1.050701
      %v817 = vmul.f32 %v785, 1.050701
      %v818 = vmul.f32 %v786, 1.050701
      %v819 = vmul.f32 %v787, 1.050701
      %v820 = vmul.f32 %v788, 1.050701
      %v821 = vmul.f32 %v789, 1.050701
      %v822 = vmul.f32 %v790, 1.050701
      %v823 = vmul.f32 %v791, 1.050701
      %v824 = vmul.f32 %v792, 1.050701
      %v825 = vmul.f32 %v793, 1.050701
      %v826 = vmul.f32 %v794, 1.050701
      %v827 = vmul.f32 %v795, 1.050701
      %v828 = vmul.f32 %v796, 1.050701
      %v829 = vmul.f32 %v797, 1.050701
      %v830 = vmul.f32 %v798, 1.050701
      %v831 = vmul.f32 %v799, 1.050701
      %v832 = vmul.f32 %v800, 1.050701
      %v833 = vmul.f32 %v801, 1.050701
      %v834 = vmul.f32 %v802, 1.050701
      %835 = vst [vmem:[%s223] sm:$0xff] %v803
      %836 = vst [vmem:[%s223 + $0x8] sm:$0xff] %v804
      %837 = vst [vmem:[%s223 + $0x10] sm:$0xff] %v805
      %838 = vst [vmem:[%s223 + $0x18] sm:$0xff] %v806
      %839 = vst [vmem:[%s223 + $0x20] sm:$0xff] %v807
      %840 = vst [vmem:[%s223 + $0x28] sm:$0xff] %v808
      %841 = vst [vmem:[%s223 + $0x30] sm:$0xff] %v809
      %842 = vst [vmem:[%s223 + $0x38] sm:$0xff] %v810
      %843 = vst [vmem:[%s223 + $0x40] sm:$0xff] %v811
      %844 = vst [vmem:[%s223 + $0x48] sm:$0xff] %v812
      %845 = vst [vmem:[%s223 + $0x50] sm:$0xff] %v813
      %846 = vst [vmem:[%s223 + $0x58] sm:$0xff] %v814
      %847 = vst [vmem:[%s223 + $0x60] sm:$0xff] %v815
      %848 = vst [vmem:[%s223 + $0x68] sm:$0xff] %v816
      %849 = vst [vmem:[%s223 + $0x70] sm:$0xff] %v817
      %850 = vst [vmem:[%s223 + $0x78] sm:$0xff] %v818
      %851 = vst [vmem:[%s223 + $0x80] sm:$0xff] %v819
      %852 = vst [vmem:[%s223 + $0x88] sm:$0xff] %v820
      %853 = vst [vmem:[%s223 + $0x90] sm:$0xff] %v821
      %854 = vst [vmem:[%s223 + $0x98] sm:$0xff] %v822
      %855 = vst [vmem:[%s223 + $0xa0] sm:$0xff] %v823
      %856 = vst [vmem:[%s223 + $0xa8] sm:$0xff] %v824
      %857 = vst [vmem:[%s223 + $0xb0] sm:$0xff] %v825
      %858 = vst [vmem:[%s223 + $0xb8] sm:$0xff] %v826
      %859 = vst [vmem:[%s223 + $0xc0] sm:$0xff] %v827
      %860 = vst [vmem:[%s223 + $0xc8] sm:$0xff] %v828
      %861 = vst [vmem:[%s223 + $0xd0] sm:$0xff] %v829
      %862 = vst [vmem:[%s223 + $0xd8] sm:$0xff] %v830
      %863 = vst [vmem:[%s223 + $0xe0] sm:$0xff] %v831
      %864 = vst [vmem:[%s223 + $0xe8] sm:$0xff] %v832
      %865 = vst [vmem:[%s223 + $0xf0] sm:$0xff] %v833
      %866 = vst [vmem:[%s223 + $0xf8] sm:$0xff] %v834
      %s867 = smul.u32 32, %s18
      %p868 = scmp.lt.s32.totalorder %s867, 63
      %s869 = scalar_select %p868, %s867, 63
      %p870 = scmp.lt.s32.totalorder %s19, 0
      %s871 = scalar_select %p870, %s19, 0
      %s872 = sadd.s32 %s871, %s869
      %s873 = smul.addr %s872, 8
      %s874 = scalar_lea.vmem %s3, %s873
      // Predicated region
      $region33: #{basic_conv2d_forward.1} parent=31 // pred_check
        %p875 = pneg %p124
      $region34: #{basic_conv2d_forward.1} parent=31 // pred_check_branch
        %877 = sbr.rel (%p875) target = $region36
      $region35: #{basic_conv2d_forward.1} parent=31 // pred_region
        %s878 = smul.u32 32, %s18
      $region36: #{basic_conv2d_forward.1} parent=31 // pred_fallthru
        _
    $region32: #{basic_conv2d_forward.1} parent=5 // pred_fallthru
      _
    %p879 = scmp.le.s32.totalorder 2, %s9
    // Predicated region
    $region37: #{basic_conv2d_forward.1} parent=5 // pred_check
      %p880 = pneg %p879
    $region38: #{basic_conv2d_forward.1} parent=5 // pred_check_branch
      %882 = sbr.rel (%p880) target = $region40
    $region39: #{basic_conv2d_forward.1} parent=5 // pred_region
      %s883 = ssub.s32 %s9, 2
      // Predicated region
      $region41: #{basic_conv2d_forward.1} parent=39 // pred_check
        %p884 = pneg %p130
      $region42: #{basic_conv2d_forward.1} parent=39 // pred_check_branch
        %886 = sbr.rel (%p884) target = $region44
      $region43: #{basic_conv2d_forward.1} parent=39 // pred_region
        %s887 = smul.u32 32, %s20
        %p888 = scmp.lt.s32.totalorder %s887, 63
        %s889 = scalar_select %p888, %s887, 63
        %p890 = scmp.lt.s32.totalorder %s21, 0
        %s891 = scalar_select %p890, %s21, 0
        %s892 = sadd.s32 %s891, %s889
        %s893 = smul.addr %s892, 8
        %s894 = scalar_lea.vmem %s3, %s893
      $region44: #{basic_conv2d_forward.1} parent=39 // pred_fallthru
        _
    $region40: #{basic_conv2d_forward.1} parent=5 // pred_fallthru
      _
  $region6: #{basic_conv2d_forward.1} parent=0 // loop_footer
    %s13 = sadd.s32 1, %s9
  $region7: #{basic_conv2d_forward.1} parent=0 // loop_footer_branch
    %8 = sbr.rel target = $region3
  $region8: #{basic_conv2d_forward.1} parent=0 // loop_exit
    _

</llo_original>
